<compile_context>
chip_gen: v6e
topology: v6e:2x2x1
jax: 0.10.0
libtpu: 0.0.40
codegen_flags: <defaults>
</compile_context>

<pallas_src>
import functools

import jax
import jax.numpy as jnp
from jax.experimental import pallas as pl
from jax.experimental.pallas import tpu as pltpu


def _round_up(v, m):
    return ((v + m - 1) // m) * m


def _kernel_accum_into_out(x_ref, w_ref, b_ref, o_ref):
    """f32 output: accumulate directly into the resident output block."""
    k = pl.program_id(2)

    @pl.when(k == 0)
    def _init():
        # Initialize with the (pre-masked) bias row broadcast over the tile.
        o_ref[...] = jnp.broadcast_to(b_ref[...], o_ref.shape)

    o_ref[...] += jnp.dot(x_ref[...], w_ref[...],
                          preferred_element_type=jnp.float32)


def _kernel_with_scratch(x_ref, w_ref, b_ref, o_ref, acc_ref):
    """Narrow output dtypes: f32 VMEM accumulator, cast once at the end."""
    k = pl.program_id(2)

    @pl.when(k == 0)
    def _init():
        acc_ref[...] = jnp.zeros_like(acc_ref)

    acc_ref[...] += jnp.dot(x_ref[...], w_ref[...],
                            preferred_element_type=jnp.float32)

    @pl.when(k == pl.num_programs(2) - 1)
    def _finalize():
        o_ref[...] = (acc_ref[...] + b_ref[...]).astype(o_ref.dtype)


def masked_linear(x, weight, weight_mask=None, bias=None, bias_mask=None,
                  *, tm=None, tn=None, tk=None, mxu_dtype=jnp.bfloat16):
    """Pallas TPU implementation of MaskedLinear.forward.

    x:           [..., K]
    weight:      [N, K]   (PyTorch F.linear convention)
    weight_mask: [N, K]   (0 => drop that connection); None => keep all
    bias:        [N] or None
    bias_mask:   [N]      (0 => drop that bias entry); None => keep all
    returns:     [..., N]
    """
    orig_shape = x.shape
    if x.ndim != 2:
        x = x.reshape(-1, orig_shape[-1])
    B, K = x.shape
    N, K2 = weight.shape
    assert K == K2, "input_dim mismatch"

    out_dtype = x.dtype
    out_itemsize = jnp.dtype(out_dtype).itemsize
    in_itemsize = jnp.dtype(mxu_dtype).itemsize

    # ---- fold masks in the wrapper (one fused pass over weight; NaN-safe) ----
    w_eff = weight if weight_mask is None else jnp.where(weight_mask == 0, 0.0, weight)
    wt = w_eff.T.astype(mxu_dtype)                       # [K, N], MXU-natural layout
    if bias is None:
        b_eff = jnp.zeros((1, N), dtype=jnp.float32)
    else:
        b = bias if bias_mask is None else jnp.where(bias_mask == 0, 0.0, bias)
        b_eff = b.reshape(1, N).astype(jnp.float32)

    x_in = x.astype(mxu_dtype)

    # ---- tile selection: multiples of (8, 128) ----
    if tk is None:
        tk = min(1024 if in_itemsize <= 2 else 512, _round_up(K, 128))
    if tm is None:
        tm = min(512, _round_up(B, 8))
    if tn is None:
        tn = min(512, _round_up(N, 128))
        # v7x megacore: avoid a 1x1 parallel grid for mid-size problems so both
        # TensorCores get a block of work.
        if (_round_up(B, tm) == tm and _round_up(N, tn) == tn
                and N >= 256 and B >= 128):
            tn = max(128, _round_up(_round_up(N, 128) // 2, 128))

    Bp, Np, Kp = _round_up(B, tm), _round_up(N, tn), _round_up(K, tk)

    if (Bp, Kp) != (B, K):
        x_in = jnp.pad(x_in, ((0, Bp - B), (0, Kp - K)))
    if (Kp, Np) != (K, N):
        wt = jnp.pad(wt, ((0, Kp - K), (0, Np - N)))
    if Np != N:
        b_eff = jnp.pad(b_eff, ((0, 0), (0, Np - N)))

    grid = (Bp // tm, Np // tn, Kp // tk)
    grid_m, grid_n, _ = grid

    use_scratch = out_dtype != jnp.float32
    kernel = _kernel_with_scratch if use_scratch else _kernel_accum_into_out
    scratch_shapes = [pltpu.VMEM((tm, tn), jnp.float32)] if use_scratch else []

    # ---- VMEM budget: double-buffered streams + output + optional scratch ----
    vmem_bytes = (2 * (tm * tk + tk * tn) * in_itemsize
                  + 2 * tm * tn * out_itemsize
                  + 2 * tn * 4
                  + (tm * tn * 4 if use_scratch else 0))
    # >= default scoped limit everywhere; < v7x 64 MiB physical.
    vmem_limit = min(48 * 1024 * 1024,
                     max(32 * 1024 * 1024, int(vmem_bytes * 1.5)))

    # Advisory: reflect actual re-streaming of x (per output-col block) and of
    # the weight (per output-row block).
    cost = pl.CostEstimate(
        flops=2 * Bp * Np * Kp,
        transcendentals=0,
        bytes_accessed=(grid_n * Bp * Kp * in_itemsize
                        + grid_m * Kp * Np * in_itemsize
                        + Bp * Np * out_itemsize
                        + Np * 4),
    )

    out_p = pl.pallas_call(
        kernel,
        out_shape=jax.ShapeDtypeStruct((Bp, Np), out_dtype),
        grid_spec=pltpu.PrefetchScalarGridSpec(
            num_scalar_prefetch=0,
            grid=grid,
            in_specs=[
                pl.BlockSpec((tm, tk), lambda i, j, k: (i, k)),  # x tile (bf16)
                pl.BlockSpec((tk, tn), lambda i, j, k: (k, j)),  # pre-masked W^T tile (bf16)
                pl.BlockSpec((1, tn), lambda i, j, k: (0, j)),   # pre-masked bias row (f32)
            ],
            out_specs=pl.BlockSpec((tm, tn), lambda i, j, k: (i, j)),
            scratch_shapes=scratch_shapes,
        ),
        compiler_params=pltpu.CompilerParams(
            dimension_semantics=("parallel", "parallel", "arbitrary"),
            vmem_limit_bytes=vmem_limit,
        ),
        cost_estimate=cost,
    )(x_in, wt, b_eff)

    out = out_p[:B, :N]
    if len(orig_shape) != 2:
        out = out.reshape(*orig_shape[:-1], N)
    return out


def _reference(x, weight, weight_mask=None, bias=None, bias_mask=None,
               mxu_dtype=jnp.bfloat16):
    """Reference with the same bf16-input / f32-accumulate numerics."""
    w_eff = weight if weight_mask is None else jnp.where(weight_mask == 0, 0.0, weight)
    y = jnp.matmul(x.astype(mxu_dtype), w_eff.T.astype(mxu_dtype),
                   preferred_element_type=jnp.float32).astype(x.dtype)
    if bias is not None:
        b_eff = bias if bias_mask is None else jnp.where(bias_mask == 0, 0.0, bias)
        y = y + b_eff
    return y


if __name__ == "__main__":
    key = jax.random.PRNGKey(0)
    k_x, k_w, k_b, k_wm, k_bm = jax.random.split(key, 5)

    # --- Test 1: small, non-aligned shapes (padding + slicing), with a NaN in a
    # masked-out weight entry to check masked_fill semantics are preserved. ---
    batch, input_dim, output_dim = 20, 100, 72
    x = jax.random.normal(k_x, (batch, input_dim), dtype=jnp.float32)
    weight = jax.random.normal(k_w, (output_dim, input_dim), dtype=jnp.float32) * 0.1
    bias = jax.random.normal(k_b, (output_dim,), dtype=jnp.float32) * 0.1
    weight_mask = (jax.random.uniform(k_wm, (output_dim, input_dim)) > 0.3).astype(jnp.float32)
    bias_mask = (jax.random.uniform(k_bm, (output_dim,)) > 0.3).astype(jnp.float32)
    weight_mask = weight_mask.at[0, 0].set(0.0)
    weight = weight.at[0, 0].set(jnp.nan)          # dropped entry; must not leak NaN

    y = jax.block_until_ready(masked_linear(x, weight, weight_mask, bias, bias_mask))
    y_ref = _reference(x, weight, weight_mask, bias, bias_mask)
    assert jnp.all(jnp.isfinite(y)), "NaN leaked through a masked weight entry"
    assert jnp.allclose(y, y_ref, atol=2e-2, rtol=2e-2), "mismatch vs reference (test 1)"

    # --- Test 2: aligned shapes, small explicit tiles -> multi-block grid:
    # exercises accumulator init / bias path across several (i, j, k) tiles. ---
    key2 = jax.random.PRNGKey(1)
    k_x2, k_w2, k_b2, k_wm2, k_bm2 = jax.random.split(key2, 5)
    B2, K2, N2 = 64, 256, 256
    x2 = jax.random.normal(k_x2, (B2, K2), dtype=jnp.float32)
    w2 = jax.random.normal(k_w2, (N2, K2), dtype=jnp.float32) * 0.05
    b2 = jax.random.normal(k_b2, (N2,), dtype=jnp.float32) * 0.05
    wm2 = (jax.random.uniform(k_wm2, (N2, K2)) > 0.25).astype(jnp.float32)
    bm2 = (jax.random.uniform(k_bm2, (N2,)) > 0.25).astype(jnp.float32)

    y2 = jax.block_until_ready(masked_linear(x2, w2, wm2, b2, bm2, tm=32, tn=128, tk=128))
    y2_ref = _reference(x2, w2, wm2, b2, bm2)
    assert jnp.allclose(y2, y2_ref, atol=2e-2, rtol=2e-2), "mismatch vs reference (test 2)"

    # --- Test 3: no mask / no bias path (weight used as-is), default tiles. ---
    y3 = jax.block_until_ready(masked_linear(x2, w2))
    y3_ref = _reference(x2, w2)
    assert jnp.allclose(y3, y3_ref, atol=2e-2, rtol=2e-2), "mismatch vs reference (test 3)"

    print("KERNEL_OK")
</pallas_src>

<mosaic_0001>
module attributes {stable_mosaic.version = 11 : i64} {
  func.func @_kernel_accum_into_out(%arg0: i32, %arg1: i32, %arg2: i32, %arg3: memref<24x128xbf16, #tpu.memory_space<vmem>>, %arg4: memref<128x128xbf16, #tpu.memory_space<vmem>>, %arg5: memref<1x128xf32, #tpu.memory_space<vmem>>, %arg6: memref<24x128xf32, #tpu.memory_space<vmem>>) attributes {dimension_semantics = [#tpu.dimension_semantics<parallel>, #tpu.dimension_semantics<parallel>, #tpu.dimension_semantics<arbitrary>], iteration_bounds = array<i64: 1, 1, 1>, scalar_prefetch = 0 : i64, scratch_operands = 0 : i64, tpu.core_type = #tpu.core_type<tc>, window_params = [{transform_indices = @transform_0, window_bounds = array<i64: 24, 128>}, {transform_indices = @transform_1, window_bounds = array<i64: 128, 128>}, {transform_indices = @transform_2, window_bounds = array<i64: 1, 128>}, {transform_indices = @transform_3, window_bounds = array<i64: 24, 128>}]} {
    %c0_i32 = arith.constant 0 : i32
    %0 = arith.cmpi eq, %arg2, %c0_i32 : i32
    %1 = arith.extui %0 : i1 to i32
    %c0_i32_0 = arith.constant 0 : i32
    %2 = arith.cmpi ne, %1, %c0_i32_0 : i32
    scf.if %2 {
      %c0_8 = arith.constant 0 : index
      %c0_9 = arith.constant 0 : index
      %9 = vector.load %arg5[%c0_8, %c0_9] : memref<1x128xf32, #tpu.memory_space<vmem>>, vector<1x128xf32>
      %10 = vector.shape_cast %9 : vector<1x128xf32> to vector<1x128xf32>
      %11 = vector.broadcast %10 : vector<1x128xf32> to vector<24x128xf32>
      %c0_10 = arith.constant 0 : index
      %c0_11 = arith.constant 0 : index
      %12 = vector.load %arg6[%c0_10, %c0_11] : memref<24x128xf32, #tpu.memory_space<vmem>>, vector<24x128xf32>
      tpu.vector_store %arg6[%c0_10, %c0_11], %11 {strides = array<i32>} : memref<24x128xf32, #tpu.memory_space<vmem>>, vector<24x128xf32>,
    } else {
    }
    %c0 = arith.constant 0 : index
    %c0_1 = arith.constant 0 : index
    %3 = vector.load %arg6[%c0, %c0_1] : memref<24x128xf32, #tpu.memory_space<vmem>>, vector<24x128xf32>
    %c0_2 = arith.constant 0 : index
    %c0_3 = arith.constant 0 : index
    %4 = vector.load %arg3[%c0_2, %c0_3] : memref<24x128xbf16, #tpu.memory_space<vmem>>, vector<24x128xbf16>
    %c0_4 = arith.constant 0 : index
    %c0_5 = arith.constant 0 : index
    %5 = vector.load %arg4[%c0_4, %c0_5] : memref<128x128xbf16, #tpu.memory_space<vmem>>, vector<128x128xbf16>
    %cst = arith.constant dense<0.000000e+00> : vector<24x128xf32>
    %6 = tpu.matmul %4, %5, %cst {dimension_numbers = #tpu.dot_dimension_numbers<[1], [0], [0], [1], [0, 0, 1, 1], [], []>} : vector<24x128xbf16>, vector<128x128xbf16>, vector<24x128xf32> -> vector<24x128xf32>
    %7 = arith.addf %3, %6 : vector<24x128xf32>
    %c0_6 = arith.constant 0 : index
    %c0_7 = arith.constant 0 : index
    %8 = vector.load %arg6[%c0_6, %c0_7] : memref<24x128xf32, #tpu.memory_space<vmem>>, vector<24x128xf32>
    tpu.vector_store %arg6[%c0_6, %c0_7], %7 {strides = array<i32>} : memref<24x128xf32, #tpu.memory_space<vmem>>, vector<24x128xf32>,
    return
  }
  func.func @transform_0(%arg0: i32, %arg1: i32, %arg2: i32) -> (i32, i32) {
    %c0_i32 = arith.constant 0 : i32
    return %arg0, %arg2 : i32, i32
  }
  func.func @transform_1(%arg0: i32, %arg1: i32, %arg2: i32) -> (i32, i32) {
    %c0_i32 = arith.constant 0 : i32
    return %arg2, %arg1 : i32, i32
  }
  func.func @transform_2(%arg0: i32, %arg1: i32, %arg2: i32) -> (i32, i32) {
    %c0_i32 = arith.constant 0 : i32
    %c0_i32_0 = arith.constant 0 : i32
    return %c0_i32, %arg1 : i32, i32
  }
  func.func @transform_3(%arg0: i32, %arg1: i32, %arg2: i32) -> (i32, i32) {
    %c0_i32 = arith.constant 0 : i32
    return %arg0, %arg1 : i32, i32
  }
}

</mosaic_0001>

<llo_original>
// kernel: tpu_custom_call.1
$region0: #{tpu_custom_call.1}
  #allocation0 [shape = 'u32[]', space=smem, size = 0x4, offset = 0x4, fixed_abs, tag = 'smem constant byte address 0x4 - core index']
  #allocation1 [shape = 'u32[144,128]{1,0:T(1,128)}', space=vmem, size = 0x12000, scoped, tag = 'internal scratch']
  %s0 = inlined_call_operand.hbm [shape: bf16[24,128], index: 0, kind: input, shape index: {}]
  %s1 = inlined_call_operand.hbm [shape: bf16[128,128], index: 1, kind: input, shape index: {}]
  %s2 = inlined_call_operand.vmem [shape: f32[1,128], index: 2, kind: input, shape index: {}]
  %s3 = inlined_call_operand.hbm [shape: f32[24,128], index: 3, kind: output, shape index: {}]
  %s4 = sld [smem:[#allocation0]]
  $region34: #{tpu_custom_call.1} parent=0
    _
  %s6 = ssub.s32 1, %s4
  %s7 = scalar_select 0, %s6, %s4
  $region1: #{tpu_custom_call.1} parent=0
    #allocation2 [shape = 'u8[6144]{0}', space=vmem, size = 0x1800, scoped, tag = 'input window, operand 0, single buffered']
    #allocation3 [shape = 's32[1]{0}', space=sflag, size = 0x4, scoped, tag = 'scoped memory for tpu_custom_call.1']
    #allocation4 [shape = 's32[1]{0}', space=sflag, size = 0x4, scoped, tag = 'scoped memory for tpu_custom_call.1']
    #allocation5 [shape = 'u8[32768]{0}', space=vmem, size = 0x8000, scoped, tag = 'input window, operand 1, single buffered']
    #allocation6 [shape = 's32[1]{0}', space=sflag, size = 0x4, scoped, tag = 'scoped memory for tpu_custom_call.1']
    #allocation7 [shape = 'u8[12288]{0}', space=vmem, size = 0x3000, scoped, tag = 'output window, operand 0, single buffered']
    %8 = vsyncpa [#allocation3], 0
    %9 = vsyncpa [#allocation6], 0
    %10 = vsyncpa [#allocation4], 0
    // Predicated region
    $region2: #{tpu_custom_call.1} parent=1 // pred_check
      _
    $region3: #{tpu_custom_call.1} parent=1 // pred_check_branch
      %12 = sbr.rel (0) target = $region5
    $region4: #{tpu_custom_call.1} parent=1 // pred_region
      %s14 = ssub.s32 192, 192
      %15 = vsyncadd [#allocation3], %s14
      %s16 = sshll.u32 [#allocation2], 4
      %s17 = int_to_ptr.vmem [resolvable:$true] %s16
      %22 = dma.hbm_to_vmem [thread:$0]  %s0, 192, %s17, [#allocation3], 64, 64, 4
    $region5: #{tpu_custom_call.1} parent=1 // pred_fallthru
      _
    // Predicated region
    $region6: #{tpu_custom_call.1} parent=1 // pred_check
      _
    $region7: #{tpu_custom_call.1} parent=1 // pred_check_branch
      %24 = sbr.rel (0) target = $region9
    $region8: #{tpu_custom_call.1} parent=1 // pred_region
      %s26 = ssub.s32 1024, 1024
      %27 = vsyncadd [#allocation6], %s26
      %s28 = sshll.u32 [#allocation5], 4
      %s29 = int_to_ptr.vmem [resolvable:$true] %s28
      %34 = dma.hbm_to_vmem [thread:$0]  %s1, 1024, %s29, [#allocation6], 64, 64, 4
    $region9: #{tpu_custom_call.1} parent=1 // pred_fallthru
      _
    // Predicated region
    $region10: #{tpu_custom_call.1} parent=1 // pred_check
      _
    $region11: #{tpu_custom_call.1} parent=1 // pred_check_branch
      %36 = sbr.rel (0) target = $region13
    $region12: #{tpu_custom_call.1} parent=1 // pred_region
      _
    $region13: #{tpu_custom_call.1} parent=1 // pred_fallthru
      _
    // Predicated region
    $region14: #{tpu_custom_call.1} parent=1 // pred_check
      _
    $region15: #{tpu_custom_call.1} parent=1 // pred_check_branch
      %38 = sbr.rel (0) target = $region17
    $region16: #{tpu_custom_call.1} parent=1 // pred_region
      %39 = dma.done [#allocation3], 192
    $region17: #{tpu_custom_call.1} parent=1 // pred_fallthru
      _
    // Predicated region
    $region18: #{tpu_custom_call.1} parent=1 // pred_check
      _
    $region19: #{tpu_custom_call.1} parent=1 // pred_check_branch
      %41 = sbr.rel (0) target = $region21
    $region20: #{tpu_custom_call.1} parent=1 // pred_region
      %42 = dma.done [#allocation6], 1024
    $region21: #{tpu_custom_call.1} parent=1 // pred_fallthru
      _
    %p44 = scmp.eq.s32.totalorder 0, 0
    // Predicated region
    $region22: #{tpu_custom_call.1} parent=1 // pred_check
      %p45 = pneg %p44
    $region23: #{tpu_custom_call.1} parent=1 // pred_check_branch
      %47 = sbr.rel (%p45) target = $region25
    $region24: #{tpu_custom_call.1} parent=1 // pred_region
      %v48 = vld [vmem:[%s2] sm:$0x1]
      %v50 = vlaneseq
      %v51 = vshrl.u32 %v50, 7
      %v52 = vsub.s32 0, %v51
      %v53 = vrot.slane %v48, %v52
      %55 = vst [vmem:[#allocation7] sm:$0xff] %v53
      %56 = vst [vmem:[#allocation7 + $0x8] sm:$0xff] %v53
      %57 = vst [vmem:[#allocation7 + $0x10] sm:$0xff] %v53
    $region25: #{tpu_custom_call.1} parent=1 // pred_fallthru
      _
    %v58 = vld [vmem:[#allocation7] sm:$0xff]
    %v59 = vld [vmem:[#allocation7 + $0x8] sm:$0xff]
    %v60 = vld [vmem:[#allocation7 + $0x10] sm:$0xff]
    %v61 = vld [vmem:[#allocation2] sm:$0xf]
    %v62 = vld [vmem:[#allocation2 + $0x4] sm:$0xf]
    %v63 = vld [vmem:[#allocation2 + $0x8] sm:$0xf]
    %v64 = vld [vmem:[#allocation5] sm:$0xf]
    %v65 = vld [vmem:[#allocation5 + $0x4] sm:$0xf]
    %v66 = vld [vmem:[#allocation5 + $0x8] sm:$0xf]
    %v67 = vld [vmem:[#allocation5 + $0xc] sm:$0xf]
    %v68 = vld [vmem:[#allocation5 + $0x10] sm:$0xf]
    %v69 = vld [vmem:[#allocation5 + $0x14] sm:$0xf]
    %v70 = vld [vmem:[#allocation5 + $0x18] sm:$0xf]
    %v71 = vld [vmem:[#allocation5 + $0x1c] sm:$0xf]
    %v72 = vld [vmem:[#allocation5 + $0x20] sm:$0xf]
    %v73 = vld [vmem:[#allocation5 + $0x24] sm:$0xf]
    %v74 = vld [vmem:[#allocation5 + $0x28] sm:$0xf]
    %v75 = vld [vmem:[#allocation5 + $0x2c] sm:$0xf]
    %v76 = vld [vmem:[#allocation5 + $0x30] sm:$0xf]
    %v77 = vld [vmem:[#allocation5 + $0x34] sm:$0xf]
    %v78 = vld [vmem:[#allocation5 + $0x38] sm:$0xf]
    %v79 = vld [vmem:[#allocation5 + $0x3c] sm:$0xf]
    %v83 = vunpack.c.l.b16 %v61
    %v84 = vunpack.c.l.b16 %v62
    %v85 = vunpack.c.l.b16 %v63
    %v86 = vpack.c.b16 %v84, %v83
    %v87 = vpack.c.b16 %v85, %v85
    %v106 = vunpack.c.l.b16 %v64
    %v107 = vunpack.c.l.b16 %v65
    %v108 = vunpack.c.l.b16 %v66
    %v109 = vunpack.c.l.b16 %v67
    %v110 = vunpack.c.l.b16 %v68
    %v111 = vunpack.c.l.b16 %v69
    %v112 = vunpack.c.l.b16 %v70
    %v113 = vunpack.c.l.b16 %v71
    %v114 = vunpack.c.l.b16 %v72
    %v115 = vunpack.c.l.b16 %v73
    %v116 = vunpack.c.l.b16 %v74
    %v117 = vunpack.c.l.b16 %v75
    %v118 = vunpack.c.l.b16 %v76
    %v119 = vunpack.c.l.b16 %v77
    %v120 = vunpack.c.l.b16 %v78
    %v121 = vunpack.c.l.b16 %v79
    %v122 = vpack.c.b16 %v107, %v106
    %v123 = vpack.c.b16 %v109, %v108
    %v124 = vpack.c.b16 %v111, %v110
    %v125 = vpack.c.b16 %v113, %v112
    %v126 = vpack.c.b16 %v115, %v114
    %v127 = vpack.c.b16 %v117, %v116
    %v128 = vpack.c.b16 %v119, %v118
    %v129 = vpack.c.b16 %v121, %v120
    %138 = vmatprep.subr.bf16.mxu0 0
    %139 = vmatpush1.bf16.msra.mxu0 %v129
    %140 = vmatprep.subr.bf16.mxu0 0
    %141 = vmatpush1.bf16.msra.mxu0 %v128
    %142 = vmatprep.subr.bf16.mxu0 0
    %143 = vmatpush1.bf16.msra.mxu0 %v127
    %144 = vmatprep.subr.bf16.mxu0 0
    %145 = vmatpush1.bf16.msra.mxu0 %v126
    %146 = vmatprep.subr.bf16.mxu0 0
    %147 = vmatpush1.bf16.msra.mxu0 %v125
    %148 = vmatprep.subr.bf16.mxu0 0
    %149 = vmatpush1.bf16.msra.mxu0 %v124
    %150 = vmatprep.subr.bf16.mxu0 0
    %151 = vmatpush1.bf16.msra.mxu0 %v123
    %152 = vmatprep.subr.bf16.mxu0 0
    %153 = vmatpush1.bf16.msra.mxu0 %v122
    %154 = vmatprep.subr.bf16.mxu0 0
    %155 = vmatpush2.bf16.msra.mxu0 0
    %156 = vmatprep.subr.bf16.mxu0 0
    %157 = vmatpush2.bf16.msra.mxu0 0
    %158 = vmatprep.subr.bf16.mxu0 0
    %159 = vmatpush2.bf16.msra.mxu0 0
    %160 = vmatprep.subr.bf16.mxu0 0
    %161 = vmatpush2.bf16.msra.mxu0 0
    %162 = vmatprep.subr.bf16.mxu0 0
    %163 = vmatpush2.bf16.msra.mxu0 0
    %164 = vmatprep.subr.bf16.mxu0 0
    %165 = vmatpush2.bf16.msra.mxu0 0
    %166 = vmatprep.subr.bf16.mxu0 0
    %167 = vmatpush2.bf16.msra.mxu0 0
    %168 = vmatprep.subr.bf16.mxu0 0
    %169 = vmatpush2.bf16.msra.mxu0 0
    %170 = vmatprep.mubr.bf16.mxu0 0
    %171 = vmatmul.mubr.bf16.gmra.mxu0 %v86
    %v172 = vpop.f32.mrf.mxu0
    %v173 = vadd.f32 0.0, %v172
    %v174 = vpop.f32.mrf.mxu0
    %v175 = vpop.f32.mrf.mxu0
    %v176 = vadd.f32 0.0, %v175
    %v177 = vpop.f32.mrf.mxu0
    %178 = vmatprep.mubr.bf16.mxu0 0
    %179 = vmatmul.mubr.bf16.gmra.mxu0 %v87
    %v180 = vpop.f32.mrf.mxu0
    %v181 = vadd.f32 0.0, %v180
    %v182 = vpop.f32.mrf.mxu0
    %v183 = vpop.f32.mrf.mxu0
    %v184 = vpop.f32.mrf.mxu0
    %185 = vdwg.mxu0
    %v186 = vadd.f32 %v58, %v173
    %v187 = vadd.f32 %v59, %v176
    %v188 = vadd.f32 %v60, %v181
    %189 = vst [vmem:[#allocation7] sm:$0xff] %v186
    %190 = vst [vmem:[#allocation7 + $0x8] sm:$0xff] %v187
    %191 = vst [vmem:[#allocation7 + $0x10] sm:$0xff] %v188
    // Predicated region
    $region26: #{tpu_custom_call.1} parent=1 // pred_check
      _
    $region27: #{tpu_custom_call.1} parent=1 // pred_check_branch
      %193 = sbr.rel (0) target = $region29
    $region28: #{tpu_custom_call.1} parent=1 // pred_region
      %s195 = ssub.s32 384, 384
      %196 = vsyncadd [#allocation4], %s195
      %s197 = sshll.u32 [#allocation7], 4
      %s198 = int_to_ptr.vmem [resolvable:$true] %s197
      %203 = dma.vmem_to_hbm [thread:$0]  %s198, 384, %s3, [#allocation4], 128, 128, 8
    $region29: #{tpu_custom_call.1} parent=1 // pred_fallthru
      _
    // Predicated region
    $region30: #{tpu_custom_call.1} parent=1 // pred_check
      _
    $region31: #{tpu_custom_call.1} parent=1 // pred_check_branch
      %205 = sbr.rel (0) target = $region33
    $region32: #{tpu_custom_call.1} parent=1 // pred_region
      %206 = dma.done [#allocation4], 384
    $region33: #{tpu_custom_call.1} parent=1 // pred_fallthru
      _
    %207 = vsyncpa [#allocation3], 1
    %208 = vsyncpa [#allocation6], 1
    %209 = vsyncpa [#allocation4], 1

</llo_original>
